<compile_context>
chip_gen: v5e
topology: v5e:2x2
jax: 0.10.0
libtpu: 0.0.40
codegen_flags: <defaults>
</compile_context>

<pallas_src>
import jax
import jax.numpy as jnp
from jax.experimental import pallas as pl
from jax.experimental.pallas import tpu as pltpu


def _make_channel_attention_kernel(thw, hw, needs_mask):
    """Builds the kernel; `needs_mask` handles a partial last spatial tile."""

    def kernel(x_ref, w1t_ref, w2t_ref, o_ref, acc_ref):
        # x_ref  : (TB, C, THW)  current input block
        # w1t_ref: (C, Cr)       fc1 weight, transposed
        # w2t_ref: (Cr, C)       fc2 weight, transposed
        # o_ref  : (TB, 1, C)    output block for this batch tile
        # acc_ref: (TB, C)       f32 running max over spatial tiles
        hw_step = pl.program_id(1)
        last_step = pl.num_programs(1) - 1

        @pl.when(hw_step == 0)
        def _init():
            acc_ref[...] = jnp.full(acc_ref.shape, -jnp.inf, acc_ref.dtype)

        def _update(masked):
            x = x_ref[...].astype(jnp.float32)                  # (TB, C, THW)
            if masked:
                # Mask lanes past the true spatial extent (partial last tile).
                lane = jax.lax.broadcasted_iota(jnp.int32, x.shape, dimension=2)
                valid = (hw_step * thw + lane) < hw
                x = jnp.where(valid, x, -jnp.inf)
            # Per-step lane reduce (XLU slot) + tiny elementwise max (VPU);
            # both hide under the HBM-bound input DMA.
            acc_ref[...] = jnp.maximum(acc_ref[...], jnp.max(x, axis=2))

        if needs_mask:
            @pl.when(hw_step < last_step)
            def _mid():
                _update(masked=False)

            @pl.when(hw_step == last_step)
            def _last():
                _update(masked=True)
        else:
            _update(masked=False)

        @pl.when(hw_step == last_step)
        def _finish():
            pooled = acc_ref[...]                               # (TB, C) f32
            # fc1 (1x1 conv) + ReLU, once per batch tile.
            h = jnp.dot(pooled, w1t_ref[...],
                        preferred_element_type=jnp.float32)
            h = jnp.maximum(h, 0.0)
            # fc2 (1x1 conv) + sigmoid.
            out = jnp.dot(h, w2t_ref[...],
                          preferred_element_type=jnp.float32)
            out = jax.nn.sigmoid(out)
            o_ref[...] = out[:, None, :].astype(o_ref.dtype)    # (TB, 1, C)

    return kernel


def channel_attention(x, w1, w2, *, batch_tile=8, max_block_bytes=None,
                      stream_dtype=None):
    """x: (N, C, H, W); w1: (Cr, C); w2: (C, Cr). Returns (N, C, 1, 1) f32."""
    N, C, H, W = x.shape
    Cr = w1.shape[0]
    HW = H * W

    if stream_dtype is not None:
        # Optional bandwidth saver (e.g. bf16) for this HBM-bound op; results
        # then differ slightly from an f32 reference.
        x = x.astype(stream_dtype)
    itemsize = jnp.dtype(x.dtype).itemsize

    # ---- generation-aware VMEM ceiling & default block budget --------------
    try:
        vmem_cap = int(pltpu.get_tpu_info().vmem_capacity_bytes)
    except Exception:
        vmem_cap = 64 << 20                         # conservative fallback
    vmem_ceiling = int(min(max(vmem_cap // 2, 16 << 20), 48 << 20))
    if max_block_bytes is None:
        max_block_bytes = int(min(vmem_ceiling // 3, 12 << 20))

    # ---- tiling decisions ---------------------------------------------------
    TB = max(1, min(batch_tile, N))
    if N >= 2:
        # Ensure >= 2 tiles along the "parallel" batch axis (v7x megacore).
        TB = min(TB, -(-N // 2))

    def _max_thw(tb):
        return (max_block_bytes // (tb * C * itemsize)) // 128 * 128

    # Prefer shrinking TB over letting the spatial tile (contiguous DMA run)
    # collapse toward 128 lanes.
    thw_goal = min(HW, 512)
    while TB > 1 and _max_thw(TB) < thw_goal:
        TB = max(1, TB // 2)

    m = _max_thw(TB)
    if HW <= m:
        THW = HW                                    # single spatial tile
    else:
        THW = max(128, m)                           # multiple of 128
    needs_mask = (HW % THW) != 0

    n_batch_tiles = pl.cdiv(N, TB)
    n_hw_tiles = pl.cdiv(HW, THW)

    x_flat = x.reshape(N, C, HW)
    w1t = w1.T.astype(jnp.float32)                  # (C, Cr)
    w2t = w2.T.astype(jnp.float32)                  # (Cr, C)

    # ---- explicit VMEM budget (double-buffered input + small scratch) ------
    x_block_bytes = TB * C * THW * itemsize
    acc_bytes = TB * C * 4
    w_bytes = 2 * (2 * C * Cr) * 4
    out_bytes = 2 * TB * C * 4
    vmem_needed = 2 * x_block_bytes + acc_bytes + w_bytes + out_bytes
    vmem_limit = int(min(max(vmem_needed + (4 << 20), 16 << 20), vmem_ceiling))
    vmem_limit = max(vmem_limit, vmem_needed + (1 << 20))

    cost = pl.CostEstimate(
        flops=4 * N * C * Cr + N * C * HW,          # two tiny matmuls + max-reduce
        transcendentals=N * C,                      # sigmoid
        bytes_accessed=N * C * HW * itemsize + 2 * C * Cr * 4 + N * C * 4,
    )

    kernel = _make_channel_attention_kernel(THW, HW, needs_mask)

    out_n1c = pl.pallas_call(
        kernel,
        out_shape=jax.ShapeDtypeStruct((N, 1, C), jnp.float32),
        grid_spec=pltpu.PrefetchScalarGridSpec(
            num_scalar_prefetch=0,
            grid=(n_batch_tiles, n_hw_tiles),
            in_specs=[
                pl.BlockSpec((TB, C, THW), lambda b, h: (b, 0, h)),
                pl.BlockSpec((C, Cr), lambda b, h: (0, 0)),
                pl.BlockSpec((Cr, C), lambda b, h: (0, 0)),
            ],
            # Per-batch-tile output block: safe with a "parallel" batch axis.
            out_specs=pl.BlockSpec((TB, 1, C), lambda b, h: (b, 0, 0)),
            scratch_shapes=[pltpu.VMEM((TB, C), jnp.float32)],
        ),
        compiler_params=pltpu.CompilerParams(
            dimension_semantics=("parallel", "arbitrary"),
            vmem_limit_bytes=vmem_limit,
        ),
        cost_estimate=cost,
    )(x_flat, w1t, w2t)

    return out_n1c.reshape(N, C, 1, 1)


def _reference(x, w1, w2):
    mx = jnp.max(x.astype(jnp.float32), axis=(2, 3))     # (N, C)
    h = jnp.maximum(mx @ w1.T.astype(jnp.float32), 0.0)
    out = jax.nn.sigmoid(h @ w2.T.astype(jnp.float32))
    return out.reshape(x.shape[0], x.shape[1], 1, 1)


if __name__ == "__main__":
    key = jax.random.PRNGKey(0)

    # ratio is hard-coded to 16 in the PyTorch module, so C must be >= 16.
    N, C, H, W = 2, 32, 16, 16
    Cr = C // 16

    kx, k1, k2, kx2 = jax.random.split(key, 4)
    x = jax.random.normal(kx, (N, C, H, W), dtype=jnp.float32)
    # PyTorch conv weights are (out, in, 1, 1); keep the squeezed (out, in).
    w1 = jax.random.normal(k1, (Cr, C), dtype=jnp.float32) * 0.1
    w2 = jax.random.normal(k2, (C, Cr), dtype=jnp.float32) * 0.1

    # Test 1: default tiling (single spatial tile, 2 parallel batch tiles).
    out = jax.block_until_ready(channel_attention(x, w1, w2))
    ref = _reference(x, w1, w2)
    assert out.shape == (N, C, 1, 1)
    assert jnp.allclose(out, ref, atol=1e-5, rtol=1e-5)

    # Test 2: force the spatial-tiled + partial-last-tile (masked) path.
    H2, W2 = 20, 20                                   # HW = 400 -> 256 + masked 144
    x2 = jax.random.normal(kx2, (N, C, H2, W2), dtype=jnp.float32)
    out2 = jax.block_until_ready(
        channel_attention(x2, w1, w2, max_block_bytes=32 * 1024))
    ref2 = _reference(x2, w1, w2)
    assert out2.shape == (N, C, 1, 1)
    assert jnp.allclose(out2, ref2, atol=1e-5, rtol=1e-5)

    print("KERNEL_OK")
</pallas_src>

<mosaic_0001>
module attributes {stable_mosaic.version = 11 : i64} {
  func.func @kernel(%arg0: i32, %arg1: i32, %arg2: memref<1x32x256xf32, #tpu.memory_space<vmem>>, %arg3: memref<32x2xf32, #tpu.memory_space<vmem>>, %arg4: memref<2x32xf32, #tpu.memory_space<vmem>>, %arg5: memref<1x1x32xf32, #tpu.memory_space<vmem>>, %arg6: memref<1x32xf32, #tpu.memory_space<vmem>>) attributes {dimension_semantics = [#tpu.dimension_semantics<parallel>, #tpu.dimension_semantics<arbitrary>], iteration_bounds = array<i64: 2, 1>, scalar_prefetch = 0 : i64, scratch_operands = 1 : i64, tpu.core_type = #tpu.core_type<tc>, window_params = [{transform_indices = @transform_0, window_bounds = array<i64: 1, 32, 256>}, {pipeline_mode = #tpu.pipeline_mode<synchronous>, transform_indices = @transform_1, window_bounds = array<i64: 32, 2>}, {pipeline_mode = #tpu.pipeline_mode<synchronous>, transform_indices = @transform_2, window_bounds = array<i64: 2, 32>}, {transform_indices = @transform_3, window_bounds = array<i64: 1, 1, 32>}]} {
    %c0_i32 = arith.constant 0 : i32
    %0 = arith.cmpi eq, %arg1, %c0_i32 : i32
    %1 = arith.extui %0 : i1 to i32
    %c0_i32_0 = arith.constant 0 : i32
    %2 = arith.cmpi ne, %1, %c0_i32_0 : i32
    scf.if %2 {
      %cst_9 = arith.constant 0xFF800000 : f32
      %11 = vector.broadcast %cst_9 : f32 to vector<1x32xf32>
      %c0_10 = arith.constant 0 : index
      %c0_11 = arith.constant 0 : index
      %12 = vector.load %arg6[%c0_10, %c0_11] : memref<1x32xf32, #tpu.memory_space<vmem>>, vector<1x32xf32>
      tpu.vector_store %arg6[%c0_10, %c0_11], %11 {strides = array<i32>} : memref<1x32xf32, #tpu.memory_space<vmem>>, vector<1x32xf32>,
    } else {
    }
    %c0 = arith.constant 0 : index
    %c0_1 = arith.constant 0 : index
    %c0_2 = arith.constant 0 : index
    %3 = vector.load %arg2[%c0, %c0_1, %c0_2] : memref<1x32x256xf32, #tpu.memory_space<vmem>>, vector<1x32x256xf32>
    %c0_3 = arith.constant 0 : index
    %c0_4 = arith.constant 0 : index
    %4 = vector.load %arg6[%c0_3, %c0_4] : memref<1x32xf32, #tpu.memory_space<vmem>>, vector<1x32xf32>
    %cst = arith.constant dense<0xFF800000> : vector<1x32xf32>
    %5 = vector.multi_reduction <maximumf>, %3, %cst [2] : vector<1x32x256xf32> to vector<1x32xf32>
    %6 = arith.maximumf %4, %5 : vector<1x32xf32>
    %c0_5 = arith.constant 0 : index
    %c0_6 = arith.constant 0 : index
    %7 = vector.load %arg6[%c0_5, %c0_6] : memref<1x32xf32, #tpu.memory_space<vmem>>, vector<1x32xf32>
    tpu.vector_store %arg6[%c0_5, %c0_6], %6 {strides = array<i32>} : memref<1x32xf32, #tpu.memory_space<vmem>>, vector<1x32xf32>,
    %c0_i32_7 = arith.constant 0 : i32
    %8 = arith.cmpi eq, %arg1, %c0_i32_7 : i32
    %9 = arith.extui %8 : i1 to i32
    %c0_i32_8 = arith.constant 0 : i32
    %10 = arith.cmpi ne, %9, %c0_i32_8 : i32
    scf.if %10 {
      %c0_9 = arith.constant 0 : index
      %c0_10 = arith.constant 0 : index
      %11 = vector.load %arg6[%c0_9, %c0_10] : memref<1x32xf32, #tpu.memory_space<vmem>>, vector<1x32xf32>
      %c0_11 = arith.constant 0 : index
      %c0_12 = arith.constant 0 : index
      %12 = vector.load %arg3[%c0_11, %c0_12] : memref<32x2xf32, #tpu.memory_space<vmem>>, vector<32x2xf32>
      %cst_13 = arith.constant dense<0.000000e+00> : vector<1x2xf32>
      %13 = tpu.matmul %11, %12, %cst_13 {dimension_numbers = #tpu.dot_dimension_numbers<[1], [0], [0], [1], [0, 0, 1, 1], [], []>} : vector<1x32xf32>, vector<32x2xf32>, vector<1x2xf32> -> vector<1x2xf32>
      %cst_14 = arith.constant 0.000000e+00 : f32
      %14 = vector.broadcast %cst_14 : f32 to vector<1x2xf32>
      %15 = arith.maximumf %13, %14 : vector<1x2xf32>
      %c0_15 = arith.constant 0 : index
      %c0_16 = arith.constant 0 : index
      %16 = vector.load %arg4[%c0_15, %c0_16] : memref<2x32xf32, #tpu.memory_space<vmem>>, vector<2x32xf32>
      %cst_17 = arith.constant dense<0.000000e+00> : vector<1x32xf32>
      %17 = tpu.matmul %15, %16, %cst_17 {dimension_numbers = #tpu.dot_dimension_numbers<[1], [0], [0], [1], [0, 0, 1, 1], [], []>} : vector<1x2xf32>, vector<2x32xf32>, vector<1x32xf32> -> vector<1x32xf32>
      %18 = arith.negf %17 : vector<1x32xf32>
      %19 = math.exp %18 : vector<1x32xf32>
      %cst_18 = arith.constant 1.000000e+00 : f32
      %20 = vector.broadcast %cst_18 : f32 to vector<1x32xf32>
      %21 = arith.addf %20, %19 : vector<1x32xf32>
      %22 = arith.divf %20, %21 : vector<1x32xf32>
      %23 = vector.shape_cast %22 : vector<1x32xf32> to vector<1x1x32xf32>
      %c0_19 = arith.constant 0 : index
      %c0_20 = arith.constant 0 : index
      %c0_21 = arith.constant 0 : index
      %24 = vector.load %arg5[%c0_19, %c0_20, %c0_21] : memref<1x1x32xf32, #tpu.memory_space<vmem>>, vector<1x1x32xf32>
      tpu.vector_store %arg5[%c0_19, %c0_20, %c0_21], %23 {strides = array<i32>} : memref<1x1x32xf32, #tpu.memory_space<vmem>>, vector<1x1x32xf32>,
    } else {
    }
    return
  }
  func.func @transform_0(%arg0: i32, %arg1: i32) -> (i32, i32, i32) {
    %c0_i32 = arith.constant 0 : i32
    %c0_i32_0 = arith.constant 0 : i32
    return %arg0, %c0_i32, %arg1 : i32, i32, i32
  }
  func.func @transform_1(%arg0: i32, %arg1: i32) -> (i32, i32) {
    %c0_i32 = arith.constant 0 : i32
    %c0_i32_0 = arith.constant 0 : i32
    %c0_i32_1 = arith.constant 0 : i32
    return %c0_i32, %c0_i32_0 : i32, i32
  }
  func.func @transform_2(%arg0: i32, %arg1: i32) -> (i32, i32) {
    %c0_i32 = arith.constant 0 : i32
    %c0_i32_0 = arith.constant 0 : i32
    %c0_i32_1 = arith.constant 0 : i32
    return %c0_i32, %c0_i32_0 : i32, i32
  }
  func.func @transform_3(%arg0: i32, %arg1: i32) -> (i32, i32, i32) {
    %c0_i32 = arith.constant 0 : i32
    %c0_i32_0 = arith.constant 0 : i32
    %c0_i32_1 = arith.constant 0 : i32
    return %arg0, %c0_i32, %c0_i32_0 : i32, i32, i32
  }
}

</mosaic_0001>

<llo_original>
// kernel: tpu_custom_call.1
$region0: #{tpu_custom_call.1}
  #allocation0 [shape = 'u32[]', space=smem, size = 0x4, offset = 0x4, fixed_abs, tag = 'smem constant byte address 0x4 - core index']
  #allocation1 [shape = 'u32[72,128]{1,0:T(1,128)}', space=vmem, size = 0x9000, scoped, tag = 'internal scratch']
  #allocation2 [shape = 'f32[1,32]{1,0:T(1,128)}', space=vmem, size = 0x200, scoped, tag = 'scratch operand']
  %s0 = inlined_call_operand.hbm [shape: f32[2,32,256], index: 0, kind: input, shape index: {}]
  %s1 = inlined_call_operand.vmem [shape: f32[32,2], index: 1, kind: input, shape index: {}]
  %s2 = inlined_call_operand.vmem [shape: f32[2,32], index: 2, kind: input, shape index: {}]
  %s3 = inlined_call_operand.hbm [shape: f32[2,1,32], index: 3, kind: output, shape index: {}]
  %s4 = sld [smem:[#allocation0]]
  $region57: #{tpu_custom_call.1} parent=0
    _
  %s6 = ssub.s32 1, %s4
  %s7 = scalar_select 0, %s6, %s4
  $region1: #{tpu_custom_call.1} parent=0
    #allocation3 [shape = 'u8[65536]{0}', space=vmem, size = 0x10000, scoped, tag = 'input window, operand 0']
    #allocation4 [shape = 's32[2]{0}', space=sflag, size = 0x8, scoped, tag = 'scoped memory for tpu_custom_call.1']
    #allocation5 [shape = 's32[2]{0}', space=sflag, size = 0x8, scoped, tag = 'scoped memory for tpu_custom_call.1']
    #allocation6 [shape = 'u8[1024]{0}', space=vmem, size = 0x400, scoped, tag = 'output window, operand 0']
    %8 = vsyncpa [#allocation4], 0
    %s9 = scalar_lea.sflag [#allocation4], 1
    %10 = vsyncpa %s9, 0
    %11 = vsyncpa [#allocation5], 0
    %s12 = scalar_lea.sflag [#allocation5], 1
    %13 = vsyncpa %s12, 0
    loop: start=0, step=1, limit=4
    $region2: #{tpu_custom_call.1} parent=1 // loop_pre_header
      _
    $region3: #{tpu_custom_call.1} parent=1 // loop_header
      %s15 = sphi 0, %s19
      %p16 = scmp.ge.s32.totalorder %s15, 4
      %s22 = sphi 0, %s34
      %s23 = sphi 0, %s30
      %s24 = sphi 0, %s22
      %s25 = sphi 0, %s23
      %s26 = sphi 0, %s24
      %s27 = sphi 0, %s25
      %s39 = sphi 0, %s41
      %s42 = sphi 0, %s39
      %s43 = sphi 0, %s42
      %s59 = sphi 0, %s43
      %s63 = sphi 0, %s63
      %s65 = sphi 0, %s63
      %s66 = sphi 0, %s65
      %s80 = sphi 0, %s66
      %s84 = sphi 0, %s84
      %s86 = sphi 0, %s84
      %s87 = sphi 0, %s86
      %s101 = sphi 0, %s87
      %s107 = sphi 0, %s109
      %s110 = sphi 0, %s107
      %s111 = sphi 0, %s110
      %s127 = sphi 0, %s111
    $region4: #{tpu_custom_call.1} parent=1 // loop_header_branch
      %18 = sbr.rel (%p16) target = $region8
    $region5: #{tpu_custom_call.1} parent=1 // loop_body
      %s20 = ssub.s32 %s15, 1
      %s21 = ssub.s32 %s15, 2
      %s28 = sadd.s32 1, %s23
      %p29 = scmp.ge.s32.totalorder %s28, 1
      %s30 = scalar_select %p29, 0, %s28
      %s31 = sadd.s32 1, %s22
      %s32 = scalar_select %p29, %s31, %s22
      %p33 = scmp.ge.s32.totalorder %s32, 2
      %s34 = scalar_select %p33, 0, %s32
      %s35 = ssub.s32 %s22, %s34
      %s36 = ssub.s32 %s23, %s30
      %s37 = sor.u32 %s35, %s36
      %p38 = scmp.eq.s32.totalorder %s37, 0
      %s40 = sadd.s32 %s39, 1
      %s41 = scalar_select %p38, %s39, %s40
      %p44 = pneg %p38
      %p45 = scmp.eq.s32.totalorder %s15, 1
      %p46 = por %p44, %p45
      %p47 = scmp.ne.s32.totalorder %s39, %s42
      %p48 = scmp.eq.s32.totalorder %s15, 0
      %p49 = por %p47, %p48
      %p50 = scmp.ne.s32.totalorder %s39, %s42
      %p51 = scmp.eq.s32.totalorder %s20, 1
      %p52 = por %p50, %p51
      %p53 = scmp.ne.s32.totalorder %s42, %s43
      %p54 = scmp.eq.s32.totalorder %s20, 0
      %p55 = por %p53, %p54
      %p56 = scmp.ne.s32.totalorder %s42, %s43
      %p57 = scmp.eq.s32.totalorder %s21, 1
      %p58 = por %p56, %p57
      %p60 = scmp.ne.s32.totalorder %s43, %s59
      %p61 = scmp.eq.s32.totalorder %s21, 0
      %p62 = por %p60, %p61
      %s64 = sadd.s32 %s63, 1
      %p67 = scmp.eq.s32.totalorder %s15, 1
      %p68 = scmp.ne.s32.totalorder %s63, %s65
      %p69 = scmp.eq.s32.totalorder %s15, 0
      %p70 = por %p68, %p69
      %p71 = scmp.ne.s32.totalorder %s63, %s65
      %p72 = scmp.eq.s32.totalorder %s20, 1
      %p73 = por %p71, %p72
      %p74 = scmp.ne.s32.totalorder %s65, %s66
      %p75 = scmp.eq.s32.totalorder %s20, 0
      %p76 = por %p74, %p75
      %p77 = scmp.ne.s32.totalorder %s65, %s66
      %p78 = scmp.eq.s32.totalorder %s21, 1
      %p79 = por %p77, %p78
      %p81 = scmp.ne.s32.totalorder %s66, %s80
      %p82 = scmp.eq.s32.totalorder %s21, 0
      %p83 = por %p81, %p82
      %s85 = sadd.s32 %s84, 1
      %p88 = scmp.eq.s32.totalorder %s15, 1
      %p89 = scmp.ne.s32.totalorder %s84, %s86
      %p90 = scmp.eq.s32.totalorder %s15, 0
      %p91 = por %p89, %p90
      %p92 = scmp.ne.s32.totalorder %s84, %s86
      %p93 = scmp.eq.s32.totalorder %s20, 1
      %p94 = por %p92, %p93
      %p95 = scmp.ne.s32.totalorder %s86, %s87
      %p96 = scmp.eq.s32.totalorder %s20, 0
      %p97 = por %p95, %p96
      %p98 = scmp.ne.s32.totalorder %s86, %s87
      %p99 = scmp.eq.s32.totalorder %s21, 1
      %p100 = por %p98, %p99
      %p102 = scmp.ne.s32.totalorder %s87, %s101
      %p103 = scmp.eq.s32.totalorder %s21, 0
      %p104 = por %p102, %p103
      %s105 = ssub.s32 %s22, %s34
      %p106 = scmp.eq.s32.totalorder %s105, 0
      %s108 = sadd.s32 %s107, 1
      %s109 = scalar_select %p106, %s107, %s108
      %p112 = pneg %p106
      %p113 = scmp.eq.s32.totalorder %s15, 1
      %p114 = por %p112, %p113
      %p115 = scmp.ne.s32.totalorder %s107, %s110
      %p116 = scmp.eq.s32.totalorder %s15, 0
      %p117 = por %p115, %p116
      %p118 = scmp.ne.s32.totalorder %s107, %s110
      %p119 = scmp.eq.s32.totalorder %s20, 1
      %p120 = por %p118, %p119
      %p121 = scmp.ne.s32.totalorder %s110, %s111
      %p122 = scmp.eq.s32.totalorder %s20, 0
      %p123 = por %p121, %p122
      %p124 = scmp.ne.s32.totalorder %s110, %s111
      %p125 = scmp.eq.s32.totalorder %s21, 1
      %p126 = por %p124, %p125
      %p128 = scmp.ne.s32.totalorder %s111, %s127
      %p129 = scmp.eq.s32.totalorder %s21, 0
      %p130 = por %p128, %p129
      %p131 = scmp.le.s32.totalorder 1, %s15
      %p132 = scmp.lt.s32.totalorder %s15, 3
      %p133 = pnand %p131, %p132
      %p134 = pneg %p133
      // Predicated region
      $region9: #{tpu_custom_call.1} parent=5 // pred_check
        _
      $region10: #{tpu_custom_call.1} parent=5 // pred_check_branch
        %136 = sbr.rel (%p133) target = $region12
      $region11: #{tpu_custom_call.1} parent=5 // pred_region
        %s137 = ssub.s32 %s15, 1
        // Predicated region
        $region13: #{tpu_custom_call.1} parent=11 // pred_check
          %p138 = pneg %p76
        $region14: #{tpu_custom_call.1} parent=11 // pred_check_branch
          %140 = sbr.rel (%p138) target = $region16
        $region15: #{tpu_custom_call.1} parent=11 // pred_region
          _
        $region16: #{tpu_custom_call.1} parent=11 // pred_fallthru
          _
        // Predicated region
        $region17: #{tpu_custom_call.1} parent=11 // pred_check
          %p141 = pneg %p97
        $region18: #{tpu_custom_call.1} parent=11 // pred_check_branch
          %143 = sbr.rel (%p141) target = $region20
        $region19: #{tpu_custom_call.1} parent=11 // pred_region
          _
        $region20: #{tpu_custom_call.1} parent=11 // pred_fallthru
          _
      $region12: #{tpu_custom_call.1} parent=5 // pred_fallthru
        _
      %p144 = scmp.lt.s32.totalorder %s15, 2
      // Predicated region
      $region21: #{tpu_custom_call.1} parent=5 // pred_check
        %p145 = pneg %p144
      $region22: #{tpu_custom_call.1} parent=5 // pred_check_branch
        %147 = sbr.rel (%p145) target = $region24
      $region23: #{tpu_custom_call.1} parent=5 // pred_region
        // Predicated region
        $region25: #{tpu_custom_call.1} parent=23 // pred_check
          %p148 = pneg %p49
        $region26: #{tpu_custom_call.1} parent=23 // pred_check_branch
          %150 = sbr.rel (%p148) target = $region28
        $region27: #{tpu_custom_call.1} parent=23 // pred_region
          %s151 = sand.u32 %s39, 1
          %s152 = scalar_lea.sflag [#allocation4], %s151
          %s153 = sand.u32 %s39, 1
          %s154 = smul.addr %s153, 64
          %s155 = scalar_lea.vmem [#allocation3], %s154
          %s156 = smul.u32 2, %s23
          %158 = vsyncadd %s152, 0
          %s159 = smul.addr %s22, 8
          %s160 = sadd.s32 %s156, %s159
          %s161 = smul.addr %s160, 8
          %s162 = scalar_lea.hbm %s0, %s161
          %s163 = sshll.u32 %s162, 4
          %s164 = int_to_ptr.hbm [resolvable:$true] %s163
          %s165 = sshll.u32 %s155, 4
          %s166 = int_to_ptr.vmem [resolvable:$true] %s165
          %171 = dma.hbm_to_vmem [thread:$0]  %s164, 1024, %s166, %s152, 256, 256, 16
        $region28: #{tpu_custom_call.1} parent=23 // pred_fallthru
          _
      $region24: #{tpu_custom_call.1} parent=5 // pred_fallthru
        _
      %p172 = scmp.le.s32.totalorder 1, %s15
      %p173 = scmp.lt.s32.totalorder %s15, 3
      %p174 = pnand %p172, %p173
      %p175 = pneg %p174
      // Predicated region
      $region29: #{tpu_custom_call.1} parent=5 // pred_check
        _
      $region30: #{tpu_custom_call.1} parent=5 // pred_check_branch
        %177 = sbr.rel (%p174) target = $region32
      $region31: #{tpu_custom_call.1} parent=5 // pred_region
        %s178 = ssub.s32 %s15, 1
        %s179 = sand.u32 %s42, 1
        %s180 = scalar_lea.sflag [#allocation4], %s179
        %s181 = sand.u32 %s42, 1
        %s182 = smul.addr %s181, 64
        %s183 = scalar_lea.vmem [#allocation3], %s182
        // Predicated region
        $region33: #{tpu_custom_call.1} parent=31 // pred_check
          %p184 = pneg %p55
        $region34: #{tpu_custom_call.1} parent=31 // pred_check_branch
          %186 = sbr.rel (%p184) target = $region36
        $region35: #{tpu_custom_call.1} parent=31 // pred_region
          %188 = dma.done %s180, 1024
        $region36: #{tpu_custom_call.1} parent=31 // pred_fallthru
          _
        %s189 = sand.u32 %s42, 1
        %s190 = scalar_lea.sflag [#allocation4], %s189
        %s191 = sand.u32 %s42, 1
        %s192 = smul.addr %s191, 64
        %s193 = scalar_lea.vmem [#allocation3], %s192
        %p194 = pneg %p55
        %p195 = pneg %p52
        %p196 = pneg %p76
        %p197 = pneg %p73
        %p198 = pneg %p97
        %p199 = pneg %p94
        %p200 = pneg %p123
        %p201 = pneg %p120
        %s202 = sand.u32 %s110, 1
        %s203 = scalar_lea.sflag [#allocation5], %s202
        %s204 = sand.u32 %s110, 1
        %s205 = scalar_lea.vmem [#allocation6], %s204
        %s206 = smul.u32 2, %s25
        %p207 = scmp.eq.s32.totalorder %s25, 0
        // Predicated region
        $region37: #{tpu_custom_call.1} parent=31 // pred_check
          %p208 = pneg %p207
        $region38: #{tpu_custom_call.1} parent=31 // pred_check_branch
          %210 = sbr.rel (%p208) target = $region40
        $region39: #{tpu_custom_call.1} parent=31 // pred_region
          %vm211 = vcmask 253952
          %212 = vst.msk [vmem:[#allocation2] sm:$0x1] %vm211, -inf
        $region40: #{tpu_custom_call.1} parent=31 // pred_fallthru
          _
        %v213 = vld [vmem:[%s183] sm:$0xff]
        %v214 = vld [vmem:[%s183 + $0x8] sm:$0xff]
        %v215 = vld [vmem:[%s183 + $0x10] sm:$0xff]
        %v216 = vld [vmem:[%s183 + $0x18] sm:$0xff]
        %v217 = vld [vmem:[%s183 + $0x20] sm:$0xff]
        %v218 = vld [vmem:[%s183 + $0x28] sm:$0xff]
        %v219 = vld [vmem:[%s183 + $0x30] sm:$0xff]
        %v220 = vld [vmem:[%s183 + $0x38] sm:$0xff]
        %v221 = vld [vmem:[#allocation2] sm:$0x1]
        %v222 = vmax.f32 %v213, %v214
        %223 = vmax.xlane.f32.xlu0 %v222
        %v224 = vpop.xlane.xlu0 %223
        %v225 = vmax.f32 %v215, %v216
        %226 = vmax.xlane.f32.xlu0 %v225
        %v227 = vpop.xlane.xlu0 %226
        %v228 = vmax.f32 %v217, %v218
        %229 = vmax.xlane.f32.xlu0 %v228
        %v230 = vpop.xlane.xlu0 %229
        %v231 = vmax.f32 %v219, %v220
        %232 = vmax.xlane.f32.xlu0 %v231
        %v233 = vpop.xlane.xlu0 %232
        %v238 = vperm.slane %v224, 0
        %v239 = vperm.slane %v224, 1
        %v240 = vperm.slane %v224, 2
        %v241 = vperm.slane %v224, 3
        %v242 = vperm.slane %v224, 4
        %v243 = vperm.slane %v224, 5
        %v244 = vperm.slane %v224, 6
        %v245 = vperm.slane %v224, 7
        %v246 = vperm.slane %v227, 0
        %v247 = vperm.slane %v227, 1
        %v248 = vperm.slane %v227, 2
        %v249 = vperm.slane %v227, 3
        %v250 = vperm.slane %v227, 4
        %v251 = vperm.slane %v227, 5
        %v252 = vperm.slane %v227, 6
        %v253 = vperm.slane %v227, 7
        %v254 = vperm.slane %v230, 0
        %v255 = vperm.slane %v230, 1
        %v256 = vperm.slane %v230, 2
        %v257 = vperm.slane %v230, 3
        %v258 = vperm.slane %v230, 4
        %v259 = vperm.slane %v230, 5
        %v260 = vperm.slane %v230, 6
        %v261 = vperm.slane %v230, 7
        %v262 = vperm.slane %v233, 0
        %v263 = vperm.slane %v233, 1
        %v264 = vperm.slane %v233, 2
        %v265 = vperm.slane %v233, 3
        %v266 = vperm.slane %v233, 4
        %v267 = vperm.slane %v233, 5
        %v268 = vperm.slane %v233, 6
        %v269 = vperm.slane %v233, 7
        %270 = vst [vmem:[#allocation1] ss:$9 sm:$0xff] %v238
        %s271 = scalar_lea.vmem [#allocation1], 1
        %272 = vst [vmem:[%s271] ss:$9 sm:$0xff] %v239
        %s273 = scalar_lea.vmem [#allocation1], 2
        %274 = vst [vmem:[%s273] ss:$9 sm:$0xff] %v240
        %s275 = scalar_lea.vmem [#allocation1], 3
        %276 = vst [vmem:[%s275] ss:$9 sm:$0xff] %v241
        %s277 = scalar_lea.vmem [#allocation1], 4
        %278 = vst [vmem:[%s277] ss:$9 sm:$0xff] %v242
        %s279 = scalar_lea.vmem [#allocation1], 5
        %280 = vst [vmem:[%s279] ss:$9 sm:$0xff] %v243
        %s281 = scalar_lea.vmem [#allocation1], 6
        %282 = vst [vmem:[%s281] ss:$9 sm:$0xff] %v244
        %s283 = scalar_lea.vmem [#allocation1], 7
        %284 = vst [vmem:[%s283] ss:$9 sm:$0xff] %v245
        %v285 = vld [vmem:[#allocation1] sm:$0xff]
        %286 = vst [vmem:[#allocation1] ss:$9 sm:$0xff] %v246
        %287 = vst [vmem:[%s271] ss:$9 sm:$0xff] %v247
        %288 = vst [vmem:[%s273] ss:$9 sm:$0xff] %v248
        %289 = vst [vmem:[%s275] ss:$9 sm:$0xff] %v249
        %290 = vst [vmem:[%s277] ss:$9 sm:$0xff] %v250
        %291 = vst [vmem:[%s279] ss:$9 sm:$0xff] %v251
        %292 = vst [vmem:[%s281] ss:$9 sm:$0xff] %v252
        %293 = vst [vmem:[%s283] ss:$9 sm:$0xff] %v253
        %v294 = vld [vmem:[#allocation1] sm:$0xff]
        %295 = vst [vmem:[#allocation1] ss:$9 sm:$0xff] %v254
        %296 = vst [vmem:[%s271] ss:$9 sm:$0xff] %v255
        %297 = vst [vmem:[%s273] ss:$9 sm:$0xff] %v256
        %298 = vst [vmem:[%s275] ss:$9 sm:$0xff] %v257
        %299 = vst [vmem:[%s277] ss:$9 sm:$0xff] %v258
        %300 = vst [vmem:[%s279] ss:$9 sm:$0xff] %v259
        %301 = vst [vmem:[%s281] ss:$9 sm:$0xff] %v260
        %302 = vst [vmem:[%s283] ss:$9 sm:$0xff] %v261
        %v303 = vld [vmem:[#allocation1] sm:$0xff]
        %304 = vst [vmem:[#allocation1] ss:$9 sm:$0xff] %v262
        %305 = vst [vmem:[%s271] ss:$9 sm:$0xff] %v263
        %306 = vst [vmem:[%s273] ss:$9 sm:$0xff] %v264
        %307 = vst [vmem:[%s275] ss:$9 sm:$0xff] %v265
        %308 = vst [vmem:[%s277] ss:$9 sm:$0xff] %v266
        %309 = vst [vmem:[%s279] ss:$9 sm:$0xff] %v267
        %310 = vst [vmem:[%s281] ss:$9 sm:$0xff] %v268
        %311 = vst [vmem:[%s283] ss:$9 sm:$0xff] %v269
        %v312 = vld [vmem:[#allocation1] sm:$0xff]
        %313 = vset.pattern.permute.xlu0 0
        %314 = vperm.xlu0 %313, %v285
        %v315 = vpop.permute.xlu0 %314
        %316 = vset.pattern.permute.xlu0 0
        %317 = vperm.xlu0 %316, %v294
        %v318 = vpop.permute.xlu0 %317
        %319 = vset.pattern.permute.xlu0 0
        %320 = vperm.xlu0 %319, %v303
        %v321 = vpop.permute.xlu0 %320
        %322 = vset.pattern.permute.xlu0 0
        %323 = vperm.xlu0 %322, %v312
        %v324 = vpop.permute.xlu0 %323
        %v325 = vlaneseq
        %v326 = vand.u32 %v325, 127
        %v327 = vperm.slane %v315, %v326
        %v328 = vadd.s32 %v326, 4294967288
        %v329 = vperm.slane %v318, %v328
        %vm330 = vcmask 130112
        %v331 = vsel %vm330, %v329, %v327
        %v332 = vadd.s32 %v326, 4294967280
        %v333 = vperm.slane %v321, %v332
        %vm334 = vcmask 195712
        %v335 = vsel %vm334, %v333, %v331
        %v336 = vadd.s32 %v326, 4294967272
        %v337 = vperm.slane %v324, %v336
        %vm338 = vcmask 261312
        %v339 = vsel %vm338, %v337, %v335
        %v341 = vmax.f32 %v221, %v339
        %vm342 = vcmask 253952
        %343 = vst.msk [vmem:[#allocation2] sm:$0x1] %vm342, %v341
        // Predicated region
        $region41: #{tpu_custom_call.1} parent=31 // pred_check
          %p344 = pneg %p207
        $region42: #{tpu_custom_call.1} parent=31 // pred_check_branch
          %346 = sbr.rel (%p344) target = $region44
        $region43: #{tpu_custom_call.1} parent=31 // pred_region
          %v347 = vld [vmem:[#allocation2] sm:$0x1]
          %v348 = vld [vmem:[%s1] sm:$0xff]
          %v349 = vld [vmem:[%s1 + $0x8] sm:$0xff]
          %v350 = vld [vmem:[%s1 + $0x10] sm:$0xff]
          %v351 = vld [vmem:[%s1 + $0x18] sm:$0xff]
          %vm352 = vcmask 261120
          %v354 = vsel %vm352, %v347, 0
          %356 = vmatpush.msra.mxu0 0.0
          %357 = vmatpush.msra.mxu0 0.0
          %358 = vmatpush.msra.mxu0 0.0
          %359 = vmatpush.msra.mxu0 0.0
          %360 = vmatpush.msra.mxu0 0.0
          %361 = vmatpush.msra.mxu0 0.0
          %362 = vmatpush.msra.mxu0 0.0
          %363 = vmatpush.msra.mxu0 0.0
          %364 = vmatpush.msra.mxu0 0.0
          %365 = vmatpush.msra.mxu0 0.0
          %366 = vmatpush.msra.mxu0 0.0
          %367 = vmatpush.msra.mxu0 0.0
          %368 = vmatpush.msra.mxu0 %v351
          %369 = vmatpush.msra.mxu0 %v350
          %370 = vmatpush.msra.mxu0 %v349
          %371 = vmatpush.msra.mxu0 %v348
          %372 = vmatmul.f32.gmra.mxu0 %v354
          %v373 = vpop.f32.mrf.mxu0
          %v374 = vadd.f32 0.0, %v373
          %375 = vdwg.mxu0
          %v376 = vmax.f32 %v374, 0.0
          %v377 = vld [vmem:[%s2] sm:$0x3]
          %vm378 = vcmask 15360
          %v380 = vsel %vm378, %v376, 0
          %vm382 = vcmask 1041408
          %v384 = vsel %vm382, %v377, 0
          %386 = vmatpush.msra.mxu0 0.0
          %387 = vmatpush.msra.mxu0 0.0
          %388 = vmatpush.msra.mxu0 0.0
          %389 = vmatpush.msra.mxu0 0.0
          %390 = vmatpush.msra.mxu0 0.0
          %391 = vmatpush.msra.mxu0 0.0
          %392 = vmatpush.msra.mxu0 0.0
          %393 = vmatpush.msra.mxu0 0.0
          %394 = vmatpush.msra.mxu0 0.0
          %395 = vmatpush.msra.mxu0 0.0
          %396 = vmatpush.msra.mxu0 0.0
          %397 = vmatpush.msra.mxu0 0.0
          %398 = vmatpush.msra.mxu0 0.0
          %399 = vmatpush.msra.mxu0 0.0
          %400 = vmatpush.msra.mxu0 0.0
          %401 = vmatpush.msra.mxu0 %v384
          %402 = vmatmul.f32.gmra.mxu0 %v380
          %v403 = vpop.f32.mrf.mxu0
          %v404 = vadd.f32 0.0, %v403
          %405 = vdwg.mxu0
          %v406 = vxor.u32 %v404, 2147483648
          %v407 = vmul.f32 %v406, 1.442695
          %v408 = vpow.pop %v407
          %v409 = vadd.f32 %v408, 1.0
          %v410 = vrcp.pop %v409
          %v411 = vmul.f32 %v409, %v410
          %v412 = vsub.f32 1.0, %v411
          %v413 = vmul.f32 %v410, %v412
          %v414 = vadd.f32 %v410, %v413
          %vm415 = vweird.f32 %v409
          %vm416 = vweird.f32 %v410
          %vm417 = vmor %vm415, %vm416
          %v418 = vsel %vm417, %v410, %v414
          %v419 = vand.u32 2147483647, %v409
          %vm420 = vcmp.eq.f32.partialorder %v419, 8.507059e+37
          %v421 = vand.u32 %v409, 2147483648
          %v422 = vor.u32 1.1754944e-38, %v421
          %v423 = vsel %vm420, %v422, %v418
          %v424 = vmul.f32 1.0, %v423
          %425 = vst.msk [vmem:[%s205] sm:$0x1] %vm342, %v424
        $region44: #{tpu_custom_call.1} parent=31 // pred_fallthru
          _
        %s426 = sand.u32 %s110, 1
        %s427 = scalar_lea.sflag [#allocation5], %s426
        %s428 = sand.u32 %s110, 1
        %s429 = scalar_lea.vmem [#allocation6], %s428
        // Predicated region
        $region45: #{tpu_custom_call.1} parent=31 // pred_check
          %p430 = pneg %p120
        $region46: #{tpu_custom_call.1} parent=31 // pred_check_branch
          %432 = sbr.rel (%p430) target = $region48
        $region47: #{tpu_custom_call.1} parent=31 // pred_region
          %434 = vsyncadd %s427, 0
          %s435 = scalar_lea.hbm %s3, %s24
          %s437 = sshll.u32 %s429, 4
          %s438 = int_to_ptr.vmem [resolvable:$true] %s437
          %s439 = sshll.u32 %s435, 4
          %s440 = int_to_ptr.hbm [resolvable:$true] %s439
          %442 = dma.vmem_to_hbm [thread:$0]  %s438, 16, %s440, %s427
        $region48: #{tpu_custom_call.1} parent=31 // pred_fallthru
          _
      $region32: #{tpu_custom_call.1} parent=5 // pred_fallthru
        _
      %p443 = scmp.le.s32.totalorder 2, %s15
      // Predicated region
      $region49: #{tpu_custom_call.1} parent=5 // pred_check
        %p444 = pneg %p443
      $region50: #{tpu_custom_call.1} parent=5 // pred_check_branch
        %446 = sbr.rel (%p444) target = $region52
      $region51: #{tpu_custom_call.1} parent=5 // pred_region
        %s447 = ssub.s32 %s15, 2
        // Predicated region
        $region53: #{tpu_custom_call.1} parent=51 // pred_check
          %p448 = pneg %p126
        $region54: #{tpu_custom_call.1} parent=51 // pred_check_branch
          %450 = sbr.rel (%p448) target = $region56
        $region55: #{tpu_custom_call.1} parent=51 // pred_region
          %s451 = sand.u32 %s111, 1
          %s452 = scalar_lea.sflag [#allocation5], %s451
          %s453 = sand.u32 %s111, 1
          %s454 = scalar_lea.vmem [#allocation6], %s453
          %456 = dma.done %s452, 16
        $region56: #{tpu_custom_call.1} parent=51 // pred_fallthru
          _
      $region52: #{tpu_custom_call.1} parent=5 // pred_fallthru
        _
    $region6: #{tpu_custom_call.1} parent=1 // loop_footer
      %s19 = sadd.s32 1, %s15
    $region7: #{tpu_custom_call.1} parent=1 // loop_footer_branch
      %14 = sbr.rel target = $region3
    $region8: #{tpu_custom_call.1} parent=1 // loop_exit
      _
    %457 = vsyncpa [#allocation4], 1
    %s458 = scalar_lea.sflag [#allocation4], 1
    %459 = vsyncpa %s458, 1
    %460 = vsyncpa [#allocation5], 1
    %s461 = scalar_lea.sflag [#allocation5], 1
    %462 = vsyncpa %s461, 1

</llo_original>
